<compile_context>
chip_gen: v5e
topology: v5e:2x2
jax: 0.10.0
libtpu: 0.0.40
codegen_flags: <defaults>
</compile_context>

<pallas_src>
import jax
import jax.numpy as jnp
import numpy as np
from jax.experimental import pallas as pl
from jax.experimental.pallas import tpu as pltpu


# --------------------------------------------------------------------------------------
# Primary path: zero-byte identity (output aliases the input HBM buffer, nothing DMA'd).
# --------------------------------------------------------------------------------------
def _noop_kernel(x_ref, o_ref):
    # Output aliases the input HBM buffer; just pin ordering, move no data.
    pltpu.touch(o_ref)


def _identity_noop(x: jax.Array) -> jax.Array:
    return pl.pallas_call(
        _noop_kernel,
        out_shape=jax.ShapeDtypeStruct(x.shape, x.dtype),
        in_specs=[pl.BlockSpec(memory_space=pl.ANY)],
        out_specs=pl.BlockSpec(memory_space=pl.ANY),
        input_output_aliases={0: 0},
        compiler_params=pltpu.CompilerParams(has_side_effects=True),
    )(x)


# --------------------------------------------------------------------------------------
# Fallback path: pipelined streaming copy (only if the no-op path fails to lower).
# --------------------------------------------------------------------------------------
_TARGET_BLOCK_BYTES = 8 * 1024 * 1024   # 8 MiB tiles (amortize ~0.35 us per grid step)
_VMEM_LIMIT_BYTES = 48 * 1024 * 1024    # in+out, double-buffered = 32 MiB, plus headroom


def _copy_kernel(x_ref, o_ref):
    o_ref[...] = x_ref[...]


def _identity_streaming_copy(x: jax.Array) -> jax.Array:
    orig_shape = x.shape
    total = x.size
    itemsize = jnp.dtype(x.dtype).itemsize
    total_bytes = total * itemsize
    cost = pl.CostEstimate(flops=0, transcendentals=0, bytes_accessed=2 * total_bytes)

    # Widest lane-dense flattening first: fewer, longer contiguous rows, unmasked vst.
    lanes = None
    for cand in (8192, 4096, 2048, 1024, 512, 256, 128):
        if total % cand == 0:
            lanes = cand
            break

    if lanes is None:
        # TODO(synk): element count not a multiple of 128.
        if x.ndim >= 2 and total_bytes > _TARGET_BLOCK_BYTES:
            # Tile only the leading dim; full trailing dims satisfy the (8,128) rule.
            row_bytes = (total // x.shape[0]) * itemsize
            tile0 = max(1, min(x.shape[0], _TARGET_BLOCK_BYTES // max(1, row_bytes)))
            block = (tile0,) + x.shape[1:]
            nd = x.ndim
            return pl.pallas_call(
                _copy_kernel,
                out_shape=jax.ShapeDtypeStruct(x.shape, x.dtype),
                grid=(pl.cdiv(x.shape[0], tile0),),
                in_specs=[pl.BlockSpec(block, lambda i: (i,) + (0,) * (nd - 1))],
                out_specs=pl.BlockSpec(block, lambda i: (i,) + (0,) * (nd - 1)),
                input_output_aliases={0: 0},
                compiler_params=pltpu.CompilerParams(
                    dimension_semantics=("parallel",),
                    vmem_limit_bytes=_VMEM_LIMIT_BYTES,
                ),
                cost_estimate=cost,
            )(x)
        # Small tensor: single whole-array block (block == full shape, (8,128) rule n/a).
        return pl.pallas_call(
            _copy_kernel,
            out_shape=jax.ShapeDtypeStruct(x.shape, x.dtype),
            in_specs=[pl.BlockSpec(x.shape, lambda: (0,) * x.ndim)],
            out_specs=pl.BlockSpec(x.shape, lambda: (0,) * x.ndim),
            input_output_aliases={0: 0},
            cost_estimate=cost,
        )(x)

    rows = total // lanes
    x2 = x.reshape(rows, lanes)

    if rows <= 32 or total_bytes <= _TARGET_BLOCK_BYTES // 2:
        # Small/medium tensor: a single full-extent block (no (8,128) constraint).
        tile_rows = rows
    else:
        # ~8 MiB tiles, rows a multiple of 32 (f32/bf16/int8/fp8 sublane packing).
        tile_rows = max(32, (_TARGET_BLOCK_BYTES // (lanes * itemsize)) // 32 * 32)
        # Keep at least 2 grid steps so v7x's two TensorCores can split the work.
        half_rows = (rows // 2) // 32 * 32
        if half_rows >= 32:
            tile_rows = min(tile_rows, half_rows)
        tile_rows = min(tile_rows, rows)

    y2 = pl.pallas_call(
        _copy_kernel,
        out_shape=jax.ShapeDtypeStruct((rows, lanes), x.dtype),
        grid=(pl.cdiv(rows, tile_rows),),
        in_specs=[pl.BlockSpec((tile_rows, lanes), lambda i: (i, 0))],
        out_specs=pl.BlockSpec((tile_rows, lanes), lambda i: (i, 0)),
        input_output_aliases={0: 0},
        compiler_params=pltpu.CompilerParams(
            dimension_semantics=("parallel",),
            vmem_limit_bytes=_VMEM_LIMIT_BYTES,
        ),
        cost_estimate=cost,
    )(x2)
    return y2.reshape(orig_shape)


def graph_neural_network_forward(x: jax.Array) -> jax.Array:
    """Pallas equivalent of GraphNeuralNetwork.forward(inputs) -> inputs."""
    try:
        return _identity_noop(x)
    except Exception:
        # Lowering of the zero-copy path failed on this JAX/libtpu; fall back to a
        # near-roofline pipelined copy with the same identity semantics.
        return _identity_streaming_copy(x)


if __name__ == "__main__":
    key = jax.random.PRNGKey(0)
    # Small NCHW-style input consistent with the module's forward: [batch, channels, H, W]
    x = jax.random.normal(key, (2, 4, 16, 16), dtype=jnp.float32)
    # Preserve a host copy: the output aliases (donates) the input buffer.
    x_host = np.asarray(jax.device_get(x))

    y = graph_neural_network_forward(x)
    jax.block_until_ready(y)

    assert y.shape == x_host.shape and y.dtype == x_host.dtype
    assert np.array_equal(np.asarray(jax.device_get(y)), x_host)
    print("KERNEL_OK")
</pallas_src>

<mosaic_0001>
module attributes {stable_mosaic.version = 11 : i64} {
  func.func @_noop_kernel(%arg0: memref<2x4x16x16xf32, #tpu.memory_space<any>>, %arg1: memref<2x4x16x16xf32, #tpu.memory_space<any>>) attributes {dimension_semantics = [], scalar_prefetch = 0 : i64, scratch_operands = 0 : i64, tpu.core_type = #tpu.core_type<tc>} {
    return
  }
}

module attributes {stable_mosaic.version = 11 : i64} {
  func.func @_copy_kernel(%arg0: i32, %arg1: memref<1x2048xf32, #tpu.memory_space<vmem>>, %arg2: memref<1x2048xf32, #tpu.memory_space<vmem>>) attributes {dimension_semantics = [#tpu.dimension_semantics<parallel>], iteration_bounds = array<i64: 1>, scalar_prefetch = 0 : i64, scratch_operands = 0 : i64, tpu.core_type = #tpu.core_type<tc>, window_params = [{transform_indices = @transform_0, window_bounds = array<i64: 1, 2048>}, {transform_indices = @transform_1, window_bounds = array<i64: 1, 2048>}]} {
    %c0 = arith.constant 0 : index
    %c0_0 = arith.constant 0 : index
    %0 = vector.load %arg1[%c0, %c0_0] : memref<1x2048xf32, #tpu.memory_space<vmem>>, vector<1x2048xf32>
    %c0_1 = arith.constant 0 : index
    %c0_2 = arith.constant 0 : index
    %1 = vector.load %arg2[%c0_1, %c0_2] : memref<1x2048xf32, #tpu.memory_space<vmem>>, vector<1x2048xf32>
    tpu.vector_store %arg2[%c0_1, %c0_2], %0 {strides = array<i32>} : memref<1x2048xf32, #tpu.memory_space<vmem>>, vector<1x2048xf32>,
    return
  }
  func.func @transform_0(%arg0: i32) -> (i32, i32) {
    %c0_i32 = arith.constant 0 : i32
    %c0_i32_0 = arith.constant 0 : i32
    return %arg0, %c0_i32 : i32, i32
  }
  func.func @transform_1(%arg0: i32) -> (i32, i32) {
    %c0_i32 = arith.constant 0 : i32
    %c0_i32_0 = arith.constant 0 : i32
    return %arg0, %c0_i32 : i32, i32
  }
}

</mosaic_0001>

<llo_original>
// kernel: tpu_custom_call.1
$region0: #{tpu_custom_call.1}
  #allocation0 [shape = 'u32[]', space=smem, size = 0x4, offset = 0x4, fixed_abs, tag = 'smem constant byte address 0x4 - core index']
  #allocation1 [shape = 'u32[72,128]{1,0:T(1,128)}', space=vmem, size = 0x9000, scoped, tag = 'internal scratch']
  %s0 = inlined_call_operand.hbm [shape: f32[2,4,16,16], index: 0, kind: input, shape index: {}, may-alias: {0,1}]
  %s1 = inlined_call_operand.hbm [shape: f32[2,4,16,16], index: 1, kind: output, shape index: {}, may-alias: {0,1}]
  %s2 = sld [smem:[#allocation0]]
  $region2: #{tpu_custom_call.1} parent=0
    _
  %s4 = ssub.s32 1, %s2
  %s5 = scalar_select 0, %s4, %s2

// kernel: tpu_custom_call.1
$region0: #{tpu_custom_call.1}
  #allocation0 [shape = 'u32[]', space=smem, size = 0x4, offset = 0x4, fixed_abs, tag = 'smem constant byte address 0x4 - core index']
  #allocation1 [shape = 'u32[72,128]{1,0:T(1,128)}', space=vmem, size = 0x9000, scoped, tag = 'internal scratch']
  %s0 = inlined_call_operand.hbm [shape: f32[1,2048], index: 0, kind: input, shape index: {}, may-alias: {0,1}]
  %s1 = inlined_call_operand.hbm [shape: f32[1,2048], index: 1, kind: output, shape index: {}, may-alias: {0,1}]
  %s2 = sld [smem:[#allocation0]]
  $region18: #{tpu_custom_call.1} parent=0
    _
  %s4 = ssub.s32 1, %s2
  %s5 = scalar_select 0, %s4, %s2
  $region1: #{tpu_custom_call.1} parent=0
    #allocation2 [shape = 'u8[8192]{0}', space=vmem, size = 0x2000, scoped, tag = 'input window, operand 0, single buffered']
    #allocation3 [shape = 's32[1]{0}', space=sflag, size = 0x4, scoped, tag = 'scoped memory for tpu_custom_call.1']
    #allocation4 [shape = 's32[1]{0}', space=sflag, size = 0x4, scoped, tag = 'scoped memory for tpu_custom_call.1']
    #allocation5 [shape = 'u8[8192]{0}', space=vmem, size = 0x2000, scoped, tag = 'output window, operand 0, single buffered']
    %6 = vsyncpa [#allocation3], 0
    %7 = vsyncpa [#allocation4], 0
    // Predicated region
    $region2: #{tpu_custom_call.1} parent=1 // pred_check
      _
    $region3: #{tpu_custom_call.1} parent=1 // pred_check_branch
      %9 = sbr.rel (0) target = $region5
    $region4: #{tpu_custom_call.1} parent=1 // pred_region
      %11 = vsyncadd [#allocation3], 0
      %s13 = sshll.u32 %s0, 4
      %s14 = int_to_ptr.hbm [resolvable:$true] %s13
      %s15 = sshll.u32 [#allocation2], 4
      %s16 = int_to_ptr.vmem [resolvable:$true] %s15
      %18 = dma.hbm_to_vmem [thread:$0]  %s14, 256, %s16, [#allocation3]
    $region5: #{tpu_custom_call.1} parent=1 // pred_fallthru
      _
    // Predicated region
    $region6: #{tpu_custom_call.1} parent=1 // pred_check
      _
    $region7: #{tpu_custom_call.1} parent=1 // pred_check_branch
      %20 = sbr.rel (0) target = $region9
    $region8: #{tpu_custom_call.1} parent=1 // pred_region
      %22 = dma.done [#allocation3], 256
    $region9: #{tpu_custom_call.1} parent=1 // pred_fallthru
      _
    %v23 = vld [vmem:[#allocation2] sm:$0xff]
    %v24 = vld [vmem:[#allocation2 + $0x8] sm:$0xff]
    %25 = vst [vmem:[#allocation5] sm:$0xff] %v23
    %26 = vst [vmem:[#allocation5 + $0x8] sm:$0xff] %v24
    // Predicated region
    $region10: #{tpu_custom_call.1} parent=1 // pred_check
      _
    $region11: #{tpu_custom_call.1} parent=1 // pred_check_branch
      %28 = sbr.rel (0) target = $region13
    $region12: #{tpu_custom_call.1} parent=1 // pred_region
      %30 = vsyncadd [#allocation4], 0
      %s32 = sshll.u32 [#allocation5], 4
      %s33 = int_to_ptr.vmem [resolvable:$true] %s32
      %s34 = sshll.u32 %s1, 4
      %s35 = int_to_ptr.hbm [resolvable:$true] %s34
      %37 = dma.vmem_to_hbm [thread:$0]  %s33, 256, %s35, [#allocation4]
    $region13: #{tpu_custom_call.1} parent=1 // pred_fallthru
      _
    // Predicated region
    $region14: #{tpu_custom_call.1} parent=1 // pred_check
      _
    $region15: #{tpu_custom_call.1} parent=1 // pred_check_branch
      %39 = sbr.rel (0) target = $region17
    $region16: #{tpu_custom_call.1} parent=1 // pred_region
      %41 = dma.done [#allocation4], 256
    $region17: #{tpu_custom_call.1} parent=1 // pred_fallthru
      _
    %42 = vsyncpa [#allocation3], 1
    %43 = vsyncpa [#allocation4], 1

</llo_original>
